<compile_context>
chip_gen: v7x
topology: tpu7x:2x2x1
jax: 0.10.0
libtpu: 0.0.40
codegen_flags: <defaults>
</compile_context>

<pallas_src>
import jax
import jax.numpy as jnp
from jax.experimental import pallas as pl
from jax.experimental.pallas import tpu as pltpu


def _round_up(x, m):
    return (x + m - 1) // m * m


def classifier_kernel(x_ref, w1_ref, b1_ref, wh_ref, bh_ref, out_ref):
    # x arrives as f32; cast to bf16 in-register right before the MXU op.
    x_bf = x_ref[...].astype(jnp.bfloat16)
    # Encoder layer 1: bf16 x @ bf16 W1 on the MXU, f32 accumulate.
    h = jnp.dot(x_bf, w1_ref[...], preferred_element_type=jnp.float32)
    # Bias add + ReLU in f32 on the VPU (v5e has no bf16 VPU path anyway).
    h = jnp.maximum(h + b1_ref[...], 0.0)
    # Folded (encoder layer 2 + classifier head): h @ (W2@Wc) + (b2@Wc + bc).
    logits = jnp.dot(h.astype(jnp.bfloat16), wh_ref[...],
                     preferred_element_type=jnp.float32) + bh_ref[...]
    # bf16 writeback halves the padded-output HBM traffic (still an unmasked,
    # lane-dense vst since n_pad is a multiple of 128).
    out_ref[...] = logits.astype(out_ref.dtype)


def classifier_forward(x, params, *, tile_b=1024):
    """x: [B, input_size] float32. Returns logits [B, num_classes] float32."""
    w1, b1, w2, b2, wc, bc = params
    B, input_size = x.shape
    hidden = w1.shape[1]
    num_classes = wc.shape[1]

    # Fold the last two linears (no nonlinearity between them).
    w_head = w2 @ wc                      # [hidden, num_classes]
    b_head = b2 @ wc + bc                 # [1, num_classes]

    # Lane-dense output block: pad head columns up to a multiple of 128.
    # (Padding columns are exactly zero, so the post-kernel slice is safe.)
    n_pad = _round_up(max(num_classes, 128), 128)
    if n_pad != num_classes:
        w_head = jnp.pad(w_head, ((0, 0), (0, n_pad - num_classes)))
        b_head = jnp.pad(b_head, ((0, 0), (0, n_pad - num_classes)))

    # Batch tile: multiple of 16 rows (bf16 output packs 16 rows per sublane
    # group); large default amortizes per-grid-step overhead.
    tile_b = _round_up(min(tile_b, _round_up(B, 16)), 16)
    if B >= 32:
        # v7x megacore: keep >= 2 grid steps so the "parallel" batch axis
        # actually shards across both TensorCores (no-op on v5e/v6e).
        tile_b = min(tile_b, _round_up(pl.cdiv(B, 2), 16))
    b_pad = _round_up(B, tile_b)
    if b_pad != B:
        # NOTE: for B % tile_b != 0 this is an extra HBM copy of x; Pallas
        # ragged-last-block masking could remove it once validated on HW.
        x = jnp.pad(x, ((0, b_pad - B), (0, 0)))

    # Weights as bf16 MXU operands (tiny one-time wrapper cast; they stay
    # VMEM-resident across grid steps via the constant index maps).
    w1_bf = w1.astype(jnp.bfloat16)
    wh_bf = w_head.astype(jnp.bfloat16)

    grid = (b_pad // tile_b,)
    out = pl.pallas_call(
        classifier_kernel,
        out_shape=jax.ShapeDtypeStruct((b_pad, n_pad), jnp.bfloat16),
        grid=grid,
        in_specs=[
            pl.BlockSpec((tile_b, input_size), lambda i: (i, 0)),   # x tiles (pipelined, f32)
            pl.BlockSpec((input_size, hidden), lambda i: (0, 0)),   # W1 (resident, bf16)
            pl.BlockSpec((1, hidden), lambda i: (0, 0)),            # b1 (resident, f32)
            pl.BlockSpec((hidden, n_pad), lambda i: (0, 0)),        # folded head W (resident, bf16)
            pl.BlockSpec((1, n_pad), lambda i: (0, 0)),             # folded head b (resident, f32)
        ],
        out_specs=pl.BlockSpec((tile_b, n_pad), lambda i: (i, 0)),
        compiler_params=pltpu.CompilerParams(
            dimension_semantics=("parallel",)),
    )(x, w1_bf, b1, wh_bf, b_head)

    # Slice the valid rows / classes; up-cast the tiny result to f32.
    return out[:B, :num_classes].astype(jnp.float32)


def init_linear(key, fan_in, fan_out):
    """Deterministic init mimicking torch.nn.Linear (uniform +-1/sqrt(fan_in)).
    Weight returned as [in, out] (transposed vs. PyTorch's [out, in])."""
    kw, kb = jax.random.split(key)
    bound = 1.0 / jnp.sqrt(jnp.float32(fan_in))
    w = jax.random.uniform(kw, (fan_in, fan_out), jnp.float32, -bound, bound)
    b = jax.random.uniform(kb, (1, fan_out), jnp.float32, -bound, bound)
    return w, b


if __name__ == "__main__":
    # Small hparams consistent with the module: encoder maps a flattened image
    # to latent_dim, classifier head maps latent_dim -> num_classes.
    batch = 8
    input_size = 256   # e.g. flattened 16x16 image
    hidden = 128
    latent_dim = 32
    num_classes = 10

    key = jax.random.PRNGKey(0)
    kx, k1, k2, k3 = jax.random.split(key, 4)

    x = jax.random.normal(kx, (batch, input_size), jnp.float32)  # [B, D]
    w1, b1 = init_linear(k1, input_size, hidden)       # encoder layer 1
    w2, b2 = init_linear(k2, hidden, latent_dim)       # encoder layer 2
    wc, bc = init_linear(k3, latent_dim, num_classes)  # classifier head

    params = (w1, b1, w2, b2, wc, bc)
    logits = classifier_forward(x, params)
    jax.block_until_ready(logits)
    assert logits.shape == (batch, num_classes)
    assert logits.dtype == jnp.float32

    # Reference 1: same bf16 casts / head fold / bf16 writeback as the kernel
    # (tight tolerance).
    w_head_ref = w2 @ wc
    b_head_ref = b2 @ wc + bc
    h_ref = jnp.maximum(
        jnp.dot(x.astype(jnp.bfloat16), w1.astype(jnp.bfloat16),
                preferred_element_type=jnp.float32) + b1, 0.0)
    ref_bf16 = (jnp.dot(h_ref.astype(jnp.bfloat16),
                        w_head_ref.astype(jnp.bfloat16),
                        preferred_element_type=jnp.float32) + b_head_ref)
    ref_bf16 = ref_bf16.astype(jnp.bfloat16).astype(jnp.float32)
    assert jnp.allclose(logits, ref_bf16, atol=2e-2, rtol=2e-2)

    # Reference 2: original unfolded f32 forward (loose tolerance for bf16).
    ref_f32 = jnp.maximum(x @ w1 + b1, 0.0) @ w2 + b2
    ref_f32 = ref_f32 @ wc + bc
    assert jnp.allclose(logits, ref_f32, atol=5e-2, rtol=5e-2)

    print("KERNEL_OK")
</pallas_src>

<mosaic_0001>
module attributes {stable_mosaic.version = 11 : i64} {
  func.func @classifier_kernel(%arg0: i32, %arg1: memref<16x256xf32, #tpu.memory_space<vmem>>, %arg2: memref<256x128xbf16, #tpu.memory_space<vmem>>, %arg3: memref<1x128xf32, #tpu.memory_space<vmem>>, %arg4: memref<128x128xbf16, #tpu.memory_space<vmem>>, %arg5: memref<1x128xf32, #tpu.memory_space<vmem>>, %arg6: memref<16x128xbf16, #tpu.memory_space<vmem>>) attributes {dimension_semantics = [#tpu.dimension_semantics<parallel>], iteration_bounds = array<i64: 1>, scalar_prefetch = 0 : i64, scratch_operands = 0 : i64, tpu.core_type = #tpu.core_type<tc>, window_params = [{transform_indices = @transform_0, window_bounds = array<i64: 16, 256>}, {pipeline_mode = #tpu.pipeline_mode<synchronous>, transform_indices = @transform_1, window_bounds = array<i64: 256, 128>}, {pipeline_mode = #tpu.pipeline_mode<synchronous>, transform_indices = @transform_2, window_bounds = array<i64: 1, 128>}, {pipeline_mode = #tpu.pipeline_mode<synchronous>, transform_indices = @transform_3, window_bounds = array<i64: 128, 128>}, {pipeline_mode = #tpu.pipeline_mode<synchronous>, transform_indices = @transform_4, window_bounds = array<i64: 1, 128>}, {transform_indices = @transform_5, window_bounds = array<i64: 16, 128>}]} {
    %c0 = arith.constant 0 : index
    %c0_0 = arith.constant 0 : index
    %0 = vector.load %arg1[%c0, %c0_0] : memref<16x256xf32, #tpu.memory_space<vmem>>, vector<16x256xf32>
    %1 = arith.truncf %0 : vector<16x256xf32> to vector<16x256xbf16>
    %c0_1 = arith.constant 0 : index
    %c0_2 = arith.constant 0 : index
    %2 = vector.load %arg2[%c0_1, %c0_2] : memref<256x128xbf16, #tpu.memory_space<vmem>>, vector<256x128xbf16>
    %cst = arith.constant dense<0.000000e+00> : vector<16x128xf32>
    %3 = tpu.matmul %1, %2, %cst {dimension_numbers = #tpu.dot_dimension_numbers<[1], [0], [0], [1], [0, 0, 1, 1], [], []>} : vector<16x256xbf16>, vector<256x128xbf16>, vector<16x128xf32> -> vector<16x128xf32>
    %c0_3 = arith.constant 0 : index
    %c0_4 = arith.constant 0 : index
    %4 = vector.load %arg3[%c0_3, %c0_4] : memref<1x128xf32, #tpu.memory_space<vmem>>, vector<1x128xf32>
    %5 = vector.broadcast %4 : vector<1x128xf32> to vector<16x128xf32>
    %6 = arith.addf %3, %5 : vector<16x128xf32>
    %cst_5 = arith.constant 0.000000e+00 : f32
    %7 = vector.broadcast %cst_5 : f32 to vector<16x128xf32>
    %8 = arith.maximumf %6, %7 : vector<16x128xf32>
    %9 = arith.truncf %8 : vector<16x128xf32> to vector<16x128xbf16>
    %c0_6 = arith.constant 0 : index
    %c0_7 = arith.constant 0 : index
    %10 = vector.load %arg4[%c0_6, %c0_7] : memref<128x128xbf16, #tpu.memory_space<vmem>>, vector<128x128xbf16>
    %cst_8 = arith.constant dense<0.000000e+00> : vector<16x128xf32>
    %11 = tpu.matmul %9, %10, %cst_8 {dimension_numbers = #tpu.dot_dimension_numbers<[1], [0], [0], [1], [0, 0, 1, 1], [], []>} : vector<16x128xbf16>, vector<128x128xbf16>, vector<16x128xf32> -> vector<16x128xf32>
    %c0_9 = arith.constant 0 : index
    %c0_10 = arith.constant 0 : index
    %12 = vector.load %arg5[%c0_9, %c0_10] : memref<1x128xf32, #tpu.memory_space<vmem>>, vector<1x128xf32>
    %13 = vector.broadcast %12 : vector<1x128xf32> to vector<16x128xf32>
    %14 = arith.addf %11, %13 : vector<16x128xf32>
    %15 = arith.truncf %14 : vector<16x128xf32> to vector<16x128xbf16>
    %c0_11 = arith.constant 0 : index
    %c0_12 = arith.constant 0 : index
    %16 = vector.load %arg6[%c0_11, %c0_12] : memref<16x128xbf16, #tpu.memory_space<vmem>>, vector<16x128xbf16>
    tpu.vector_store %arg6[%c0_11, %c0_12], %15 {strides = array<i32>} : memref<16x128xbf16, #tpu.memory_space<vmem>>, vector<16x128xbf16>,
    return
  }
  func.func @transform_0(%arg0: i32) -> (i32, i32) {
    %c0_i32 = arith.constant 0 : i32
    %c0_i32_0 = arith.constant 0 : i32
    return %arg0, %c0_i32 : i32, i32
  }
  func.func @transform_1(%arg0: i32) -> (i32, i32) {
    %c0_i32 = arith.constant 0 : i32
    %c0_i32_0 = arith.constant 0 : i32
    %c0_i32_1 = arith.constant 0 : i32
    return %c0_i32, %c0_i32_0 : i32, i32
  }
  func.func @transform_2(%arg0: i32) -> (i32, i32) {
    %c0_i32 = arith.constant 0 : i32
    %c0_i32_0 = arith.constant 0 : i32
    %c0_i32_1 = arith.constant 0 : i32
    return %c0_i32, %c0_i32_0 : i32, i32
  }
  func.func @transform_3(%arg0: i32) -> (i32, i32) {
    %c0_i32 = arith.constant 0 : i32
    %c0_i32_0 = arith.constant 0 : i32
    %c0_i32_1 = arith.constant 0 : i32
    return %c0_i32, %c0_i32_0 : i32, i32
  }
  func.func @transform_4(%arg0: i32) -> (i32, i32) {
    %c0_i32 = arith.constant 0 : i32
    %c0_i32_0 = arith.constant 0 : i32
    %c0_i32_1 = arith.constant 0 : i32
    return %c0_i32, %c0_i32_0 : i32, i32
  }
  func.func @transform_5(%arg0: i32) -> (i32, i32) {
    %c0_i32 = arith.constant 0 : i32
    %c0_i32_0 = arith.constant 0 : i32
    return %arg0, %c0_i32 : i32, i32
  }
}

</mosaic_0001>

<llo_original>
// kernel: tpu_custom_call.1
$region0: #{tpu_custom_call.1}
  #allocation0 [shape = 'u32[]', space=smem, size = 0x4, offset = 0x4, fixed_abs, tag = 'smem constant byte address 0x4 - core index']
  #allocation1 [shape = 'u32[144,128]{1,0:T(1,128)}', space=vmem, size = 0x12000, scoped, tag = 'internal scratch']
  %s0 = inlined_call_operand.hbm [shape: f32[16,256], index: 0, kind: input, shape index: {}]
  %s1 = inlined_call_operand.hbm [shape: bf16[256,128], index: 1, kind: input, shape index: {}]
  %s2 = inlined_call_operand.vmem [shape: f32[1,128], index: 2, kind: input, shape index: {}]
  %s3 = inlined_call_operand.hbm [shape: bf16[128,128], index: 3, kind: input, shape index: {}]
  %s4 = inlined_call_operand.vmem [shape: f32[1,128], index: 4, kind: input, shape index: {}]
  %s5 = inlined_call_operand.hbm [shape: bf16[16,128], index: 5, kind: output, shape index: {}]
  %s6 = sld [smem:[#allocation0]]
  $region42: #{tpu_custom_call.1} parent=0
    _
  %s8 = ssub.s32 1, %s6
  %s9 = scalar_select 0, %s8, %s6
  $region1: #{tpu_custom_call.1} parent=0
    #allocation2 [shape = 'u8[16384]{0}', space=vmem, size = 0x4000, scoped, tag = 'input window, operand 0, single buffered']
    #allocation3 [shape = 's32[1]{0}', space=sflag, size = 0x4, scoped, tag = 'scoped memory for tpu_custom_call.1']
    #allocation4 [shape = 's32[1]{0}', space=sflag, size = 0x4, scoped, tag = 'scoped memory for tpu_custom_call.1']
    #allocation5 [shape = 'u8[65536]{0}', space=vmem, size = 0x10000, scoped, tag = 'input window, operand 1, single buffered']
    #allocation6 [shape = 's32[1]{0}', space=sflag, size = 0x4, scoped, tag = 'scoped memory for tpu_custom_call.1']
    #allocation7 [shape = 'u8[32768]{0}', space=vmem, size = 0x8000, scoped, tag = 'input window, operand 3, single buffered']
    #allocation8 [shape = 'u8[4096]{0}', space=vmem, size = 0x1000, scoped, tag = 'output window, operand 0, single buffered']
    %10 = vsyncpa [#allocation3], 0
    %11 = vsyncpa [#allocation6], 0
    %12 = vsyncpa [#allocation4], 0
    // Predicated region
    $region2: #{tpu_custom_call.1} parent=1 // pred_check
      _
    $region3: #{tpu_custom_call.1} parent=1 // pred_check_branch
      %14 = sbr.rel (0) target = $region5
    $region4: #{tpu_custom_call.1} parent=1 // pred_region
      %s16 = ssub.s32 512, 512
      %17 = vsyncadd [#allocation3], %s16
      %s18 = sshll.u32 [#allocation2], 4
      %s19 = int_to_ptr.vmem [resolvable:$true] %s18
      %24 = dma.hbm_to_vmem [thread:$0]  %s0, 512, %s19, [#allocation3], 256, 256, 16
    $region5: #{tpu_custom_call.1} parent=1 // pred_fallthru
      _
    // Predicated region
    $region6: #{tpu_custom_call.1} parent=1 // pred_check
      _
    $region7: #{tpu_custom_call.1} parent=1 // pred_check_branch
      %26 = sbr.rel (0) target = $region9
    $region8: #{tpu_custom_call.1} parent=1 // pred_region
      %s28 = ssub.s32 2048, 2048
      %29 = vsyncadd [#allocation6], %s28
      %s30 = sshll.u32 [#allocation5], 4
      %s31 = int_to_ptr.vmem [resolvable:$true] %s30
      %36 = dma.hbm_to_vmem [thread:$0]  %s1, 2048, %s31, [#allocation6], 64, 64, 4
    $region9: #{tpu_custom_call.1} parent=1 // pred_fallthru
      _
    // Predicated region
    $region10: #{tpu_custom_call.1} parent=1 // pred_check
      _
    $region11: #{tpu_custom_call.1} parent=1 // pred_check_branch
      %38 = sbr.rel (0) target = $region13
    $region12: #{tpu_custom_call.1} parent=1 // pred_region
      _
    $region13: #{tpu_custom_call.1} parent=1 // pred_fallthru
      _
    // Predicated region
    $region14: #{tpu_custom_call.1} parent=1 // pred_check
      _
    $region15: #{tpu_custom_call.1} parent=1 // pred_check_branch
      %40 = sbr.rel (0) target = $region17
    $region16: #{tpu_custom_call.1} parent=1 // pred_region
      %s42 = ssub.s32 1024, 1024
      %43 = vsyncadd [#allocation6], %s42
      %s44 = sshll.u32 [#allocation7], 4
      %s45 = int_to_ptr.vmem [resolvable:$true] %s44
      %50 = dma.hbm_to_vmem [thread:$0]  %s3, 1024, %s45, [#allocation6], 64, 64, 4
    $region17: #{tpu_custom_call.1} parent=1 // pred_fallthru
      _
    // Predicated region
    $region18: #{tpu_custom_call.1} parent=1 // pred_check
      _
    $region19: #{tpu_custom_call.1} parent=1 // pred_check_branch
      %52 = sbr.rel (0) target = $region21
    $region20: #{tpu_custom_call.1} parent=1 // pred_region
      _
    $region21: #{tpu_custom_call.1} parent=1 // pred_fallthru
      _
    // Predicated region
    $region22: #{tpu_custom_call.1} parent=1 // pred_check
      _
    $region23: #{tpu_custom_call.1} parent=1 // pred_check_branch
      %54 = sbr.rel (0) target = $region25
    $region24: #{tpu_custom_call.1} parent=1 // pred_region
      %55 = dma.done [#allocation3], 512
    $region25: #{tpu_custom_call.1} parent=1 // pred_fallthru
      _
    // Predicated region
    $region26: #{tpu_custom_call.1} parent=1 // pred_check
      _
    $region27: #{tpu_custom_call.1} parent=1 // pred_check_branch
      %57 = sbr.rel (0) target = $region29
    $region28: #{tpu_custom_call.1} parent=1 // pred_region
      %58 = dma.done [#allocation6], 2048
    $region29: #{tpu_custom_call.1} parent=1 // pred_fallthru
      _
    // Predicated region
    $region30: #{tpu_custom_call.1} parent=1 // pred_check
      _
    $region31: #{tpu_custom_call.1} parent=1 // pred_check_branch
      %60 = sbr.rel (0) target = $region33
    $region32: #{tpu_custom_call.1} parent=1 // pred_region
      %61 = dma.done [#allocation6], 1024
    $region33: #{tpu_custom_call.1} parent=1 // pred_fallthru
      _
    %v63 = vld [vmem:[#allocation2] sm:$0xff]
    %v64 = vld [vmem:[#allocation2 + $0x8] sm:$0xff]
    %v65 = vld [vmem:[#allocation2 + $0x10] sm:$0xff]
    %v66 = vld [vmem:[#allocation2 + $0x18] sm:$0xff]
    %v67 = vpack.c.bf16 %v65, %v63
    %v68 = vpack.c.bf16 %v66, %v64
    %v69 = vld [vmem:[#allocation5] sm:$0xf]
    %v70 = vld [vmem:[#allocation5 + $0x4] sm:$0xf]
    %v71 = vld [vmem:[#allocation5 + $0x8] sm:$0xf]
    %v72 = vld [vmem:[#allocation5 + $0xc] sm:$0xf]
    %v73 = vld [vmem:[#allocation5 + $0x10] sm:$0xf]
    %v74 = vld [vmem:[#allocation5 + $0x14] sm:$0xf]
    %v75 = vld [vmem:[#allocation5 + $0x18] sm:$0xf]
    %v76 = vld [vmem:[#allocation5 + $0x1c] sm:$0xf]
    %v77 = vld [vmem:[#allocation5 + $0x20] sm:$0xf]
    %v78 = vld [vmem:[#allocation5 + $0x24] sm:$0xf]
    %v79 = vld [vmem:[#allocation5 + $0x28] sm:$0xf]
    %v80 = vld [vmem:[#allocation5 + $0x2c] sm:$0xf]
    %v81 = vld [vmem:[#allocation5 + $0x30] sm:$0xf]
    %v82 = vld [vmem:[#allocation5 + $0x34] sm:$0xf]
    %v83 = vld [vmem:[#allocation5 + $0x38] sm:$0xf]
    %v84 = vld [vmem:[#allocation5 + $0x3c] sm:$0xf]
    %v85 = vld [vmem:[#allocation5 + $0x40] sm:$0xf]
    %v86 = vld [vmem:[#allocation5 + $0x44] sm:$0xf]
    %v87 = vld [vmem:[#allocation5 + $0x48] sm:$0xf]
    %v88 = vld [vmem:[#allocation5 + $0x4c] sm:$0xf]
    %v89 = vld [vmem:[#allocation5 + $0x50] sm:$0xf]
    %v90 = vld [vmem:[#allocation5 + $0x54] sm:$0xf]
    %v91 = vld [vmem:[#allocation5 + $0x58] sm:$0xf]
    %v92 = vld [vmem:[#allocation5 + $0x5c] sm:$0xf]
    %v93 = vld [vmem:[#allocation5 + $0x60] sm:$0xf]
    %v94 = vld [vmem:[#allocation5 + $0x64] sm:$0xf]
    %v95 = vld [vmem:[#allocation5 + $0x68] sm:$0xf]
    %v96 = vld [vmem:[#allocation5 + $0x6c] sm:$0xf]
    %v97 = vld [vmem:[#allocation5 + $0x70] sm:$0xf]
    %v98 = vld [vmem:[#allocation5 + $0x74] sm:$0xf]
    %v99 = vld [vmem:[#allocation5 + $0x78] sm:$0xf]
    %v100 = vld [vmem:[#allocation5 + $0x7c] sm:$0xf]
    %v101 = vld [vmem:[%s2] sm:$0x1]
    %v103 = vlaneseq
    %v104 = vshrl.u32 %v103, 7
    %v105 = vsub.s32 0, %v104
    %v106 = vrot.slane %v101, %v105
    %v140 = vunpack.c.l.b16 %v69
    %v141 = vunpack.c.l.b16 %v70
    %v142 = vunpack.c.l.b16 %v71
    %v143 = vunpack.c.l.b16 %v72
    %v144 = vunpack.c.l.b16 %v73
    %v145 = vunpack.c.l.b16 %v74
    %v146 = vunpack.c.l.b16 %v75
    %v147 = vunpack.c.l.b16 %v76
    %v148 = vunpack.c.l.b16 %v77
    %v149 = vunpack.c.l.b16 %v78
    %v150 = vunpack.c.l.b16 %v79
    %v151 = vunpack.c.l.b16 %v80
    %v152 = vunpack.c.l.b16 %v81
    %v153 = vunpack.c.l.b16 %v82
    %v154 = vunpack.c.l.b16 %v83
    %v155 = vunpack.c.l.b16 %v84
    %v156 = vunpack.c.l.b16 %v85
    %v157 = vunpack.c.l.b16 %v86
    %v158 = vunpack.c.l.b16 %v87
    %v159 = vunpack.c.l.b16 %v88
    %v160 = vunpack.c.l.b16 %v89
    %v161 = vunpack.c.l.b16 %v90
    %v162 = vunpack.c.l.b16 %v91
    %v163 = vunpack.c.l.b16 %v92
    %v164 = vunpack.c.l.b16 %v93
    %v165 = vunpack.c.l.b16 %v94
    %v166 = vunpack.c.l.b16 %v95
    %v167 = vunpack.c.l.b16 %v96
    %v168 = vunpack.c.l.b16 %v97
    %v169 = vunpack.c.l.b16 %v98
    %v170 = vunpack.c.l.b16 %v99
    %v171 = vunpack.c.l.b16 %v100
    %v172 = vpack.c.b16 %v141, %v140
    %v173 = vpack.c.b16 %v143, %v142
    %v174 = vpack.c.b16 %v145, %v144
    %v175 = vpack.c.b16 %v147, %v146
    %v176 = vpack.c.b16 %v149, %v148
    %v177 = vpack.c.b16 %v151, %v150
    %v178 = vpack.c.b16 %v153, %v152
    %v179 = vpack.c.b16 %v155, %v154
    %v180 = vpack.c.b16 %v157, %v156
    %v181 = vpack.c.b16 %v159, %v158
    %v182 = vpack.c.b16 %v161, %v160
    %v183 = vpack.c.b16 %v163, %v162
    %v184 = vpack.c.b16 %v165, %v164
    %v185 = vpack.c.b16 %v167, %v166
    %v186 = vpack.c.b16 %v169, %v168
    %v187 = vpack.c.b16 %v171, %v170
    %204 = vmatprep.subr.bf16.mxu0 0
    %205 = vmatpush1.bf16.msra.mxu0 %v172
    %206 = vmatprep.subr.bf16.mxu0 0
    %207 = vmatpush1.bf16.msra.mxu0 %v173
    %208 = vmatprep.subr.bf16.mxu0 0
    %209 = vmatpush1.bf16.msra.mxu0 %v174
    %210 = vmatprep.subr.bf16.mxu0 0
    %211 = vmatpush1.bf16.msra.mxu0 %v175
    %212 = vmatprep.subr.bf16.mxu0 0
    %213 = vmatpush1.bf16.msra.mxu0 %v176
    %214 = vmatprep.subr.bf16.mxu0 0
    %215 = vmatpush1.bf16.msra.mxu0 %v177
    %216 = vmatprep.subr.bf16.mxu0 0
    %217 = vmatpush1.bf16.msra.mxu0 %v178
    %218 = vmatprep.subr.bf16.mxu0 0
    %219 = vmatpush1.bf16.msra.mxu0 %v179
    %220 = vmatprep.subr.bf16.mxu0 0
    %221 = vmatpush1.bf16.msra.mxu0 %v180
    %222 = vmatprep.subr.bf16.mxu0 0
    %223 = vmatpush1.bf16.msra.mxu0 %v181
    %224 = vmatprep.subr.bf16.mxu0 0
    %225 = vmatpush1.bf16.msra.mxu0 %v182
    %226 = vmatprep.subr.bf16.mxu0 0
    %227 = vmatpush1.bf16.msra.mxu0 %v183
    %228 = vmatprep.subr.bf16.mxu0 0
    %229 = vmatpush1.bf16.msra.mxu0 %v184
    %230 = vmatprep.subr.bf16.mxu0 0
    %231 = vmatpush1.bf16.msra.mxu0 %v185
    %232 = vmatprep.subr.bf16.mxu0 0
    %233 = vmatpush1.bf16.msra.mxu0 %v186
    %234 = vmatprep.subr.bf16.mxu0 0
    %235 = vmatpush1.bf16.msra.mxu0 %v187
    %236 = vmatprep.mubr.bf16.mxu0 %v68
    %237 = vmatmul.mubr.bf16.gmra.mrb[0].mxu0 %v67
    %v238 = vpop.f32.mrb[0].mxu0
    %v239 = vadd.f32 %v106, %v238
    %v240 = vpop.f32.mrb[0].mxu0
    %v241 = vpop.f32.mrb[0].mxu0
    %v242 = vadd.f32 %v106, %v241
    %v243 = vpop.f32.mrb[0].mxu0
    %244 = vdwg.mxu0
    %v245 = vmax.f32 %v239, 0.0
    %v246 = vmax.f32 %v242, 0.0
    %v247 = vpack.c.bf16 %v246, %v245
    %v248 = vld [vmem:[#allocation7] sm:$0xf]
    %v249 = vld [vmem:[#allocation7 + $0x4] sm:$0xf]
    %v250 = vld [vmem:[#allocation7 + $0x8] sm:$0xf]
    %v251 = vld [vmem:[#allocation7 + $0xc] sm:$0xf]
    %v252 = vld [vmem:[#allocation7 + $0x10] sm:$0xf]
    %v253 = vld [vmem:[#allocation7 + $0x14] sm:$0xf]
    %v254 = vld [vmem:[#allocation7 + $0x18] sm:$0xf]
    %v255 = vld [vmem:[#allocation7 + $0x1c] sm:$0xf]
    %v256 = vld [vmem:[#allocation7 + $0x20] sm:$0xf]
    %v257 = vld [vmem:[#allocation7 + $0x24] sm:$0xf]
    %v258 = vld [vmem:[#allocation7 + $0x28] sm:$0xf]
    %v259 = vld [vmem:[#allocation7 + $0x2c] sm:$0xf]
    %v260 = vld [vmem:[#allocation7 + $0x30] sm:$0xf]
    %v261 = vld [vmem:[#allocation7 + $0x34] sm:$0xf]
    %v262 = vld [vmem:[#allocation7 + $0x38] sm:$0xf]
    %v263 = vld [vmem:[#allocation7 + $0x3c] sm:$0xf]
    %v264 = vld [vmem:[%s4] sm:$0x1]
    %v266 = vlaneseq
    %v267 = vshrl.u32 %v266, 7
    %v268 = vsub.s32 0, %v267
    %v269 = vrot.slane %v264, %v268
    %v287 = vunpack.c.l.b16 %v248
    %v288 = vunpack.c.l.b16 %v249
    %v289 = vunpack.c.l.b16 %v250
    %v290 = vunpack.c.l.b16 %v251
    %v291 = vunpack.c.l.b16 %v252
    %v292 = vunpack.c.l.b16 %v253
    %v293 = vunpack.c.l.b16 %v254
    %v294 = vunpack.c.l.b16 %v255
    %v295 = vunpack.c.l.b16 %v256
    %v296 = vunpack.c.l.b16 %v257
    %v297 = vunpack.c.l.b16 %v258
    %v298 = vunpack.c.l.b16 %v259
    %v299 = vunpack.c.l.b16 %v260
    %v300 = vunpack.c.l.b16 %v261
    %v301 = vunpack.c.l.b16 %v262
    %v302 = vunpack.c.l.b16 %v263
    %v303 = vpack.c.b16 %v288, %v287
    %v304 = vpack.c.b16 %v290, %v289
    %v305 = vpack.c.b16 %v292, %v291
    %v306 = vpack.c.b16 %v294, %v293
    %v307 = vpack.c.b16 %v296, %v295
    %v308 = vpack.c.b16 %v298, %v297
    %v309 = vpack.c.b16 %v300, %v299
    %v310 = vpack.c.b16 %v302, %v301
    %319 = vmatprep.subr.bf16.mxu0 0
    %320 = vmatpush1.bf16.msra.mxu0 %v303
    %321 = vmatprep.subr.bf16.mxu0 0
    %322 = vmatpush1.bf16.msra.mxu0 %v304
    %323 = vmatprep.subr.bf16.mxu0 0
    %324 = vmatpush1.bf16.msra.mxu0 %v305
    %325 = vmatprep.subr.bf16.mxu0 0
    %326 = vmatpush1.bf16.msra.mxu0 %v306
    %327 = vmatprep.subr.bf16.mxu0 0
    %328 = vmatpush1.bf16.msra.mxu0 %v307
    %329 = vmatprep.subr.bf16.mxu0 0
    %330 = vmatpush1.bf16.msra.mxu0 %v308
    %331 = vmatprep.subr.bf16.mxu0 0
    %332 = vmatpush1.bf16.msra.mxu0 %v309
    %333 = vmatprep.subr.bf16.mxu0 0
    %334 = vmatpush1.bf16.msra.mxu0 %v310
    %335 = vmatprep.subr.bf16.mxu0 0
    %336 = vmatpush1.bf16.msra.mxu0 0
    %337 = vmatprep.subr.bf16.mxu0 0
    %338 = vmatpush1.bf16.msra.mxu0 0
    %339 = vmatprep.subr.bf16.mxu0 0
    %340 = vmatpush1.bf16.msra.mxu0 0
    %341 = vmatprep.subr.bf16.mxu0 0
    %342 = vmatpush1.bf16.msra.mxu0 0
    %343 = vmatprep.subr.bf16.mxu0 0
    %344 = vmatpush1.bf16.msra.mxu0 0
    %345 = vmatprep.subr.bf16.mxu0 0
    %346 = vmatpush1.bf16.msra.mxu0 0
    %347 = vmatprep.subr.bf16.mxu0 0
    %348 = vmatpush1.bf16.msra.mxu0 0
    %349 = vmatprep.subr.bf16.mxu0 0
    %350 = vmatpush1.bf16.msra.mxu0 0
    %351 = vmatprep.mubr.bf16.mxu0 0
    %352 = vmatmul.mubr.bf16.gmra.mrb[0].mxu0 %v247
    %v353 = vpop.f32.mrb[0].mxu0
    %v354 = vadd.f32 %v269, %v353
    %v355 = vpop.f32.mrb[0].mxu0
    %v356 = vpop.f32.mrb[0].mxu0
    %v357 = vadd.f32 %v269, %v356
    %v358 = vpop.f32.mrb[0].mxu0
    %359 = vdwg.mxu0
    %v360 = vpack.c.bf16 %v357, %v354
    %v362 = vunpack.c.l.b16 %v360
    %v363 = vunpack.c.h.b16 %v360
    %v364 = vpack.c.b16 %v362, %v362
    %v365 = vpack.c.b16 %v363, %v363
    %368 = vst [vmem:[#allocation8] sm:$0xf] %v364
    %369 = vst [vmem:[#allocation8 + $0x4] sm:$0xf] %v365
    // Predicated region
    $region34: #{tpu_custom_call.1} parent=1 // pred_check
      _
    $region35: #{tpu_custom_call.1} parent=1 // pred_check_branch
      %371 = sbr.rel (0) target = $region37
    $region36: #{tpu_custom_call.1} parent=1 // pred_region
      %s373 = ssub.s32 128, 128
      %374 = vsyncadd [#allocation4], %s373
      %s375 = sshll.u32 [#allocation8], 4
      %s376 = int_to_ptr.vmem [resolvable:$true] %s375
      %381 = dma.vmem_to_hbm [thread:$0]  %s376, 128, %s5, [#allocation4], 64, 64, 4
    $region37: #{tpu_custom_call.1} parent=1 // pred_fallthru
      _
    // Predicated region
    $region38: #{tpu_custom_call.1} parent=1 // pred_check
      _
    $region39: #{tpu_custom_call.1} parent=1 // pred_check_branch
      %383 = sbr.rel (0) target = $region41
    $region40: #{tpu_custom_call.1} parent=1 // pred_region
      %384 = dma.done [#allocation4], 128
    $region41: #{tpu_custom_call.1} parent=1 // pred_fallthru
      _
    %385 = vsyncpa [#allocation3], 1
    %386 = vsyncpa [#allocation6], 1
    %387 = vsyncpa [#allocation4], 1

</llo_original>
